<compile_context>
chip_gen: v6e
topology: v6e:2x2x1
jax: 0.10.0
libtpu: 0.0.40
codegen_flags: <defaults>
</compile_context>

<pallas_src>
import jax
import jax.numpy as jnp
from jax.experimental import pallas as pl
from jax.experimental.pallas import tpu as pltpu

LANE = 128
_MiB = 1 << 20


def _round_up(n, m):
    return ((n + m - 1) // m) * m


def _encoder_kernel(x_ref, w1_ref, b1_ref, w2_ref, b2_ref, w3_ref, b3_ref, o_ref):
    """Fused Linear->ReLU->Linear->ReLU->Linear on one batch tile.

    bf16 MXU operands, f32 accumulation; bias-add + ReLU in f32.
    """
    x = x_ref[...].astype(jnp.bfloat16)  # VPU cast, hidden under the MXU.

    h1 = jnp.dot(x, w1_ref[...], preferred_element_type=jnp.float32) + b1_ref[...]
    h1 = jnp.maximum(h1, 0.0).astype(jnp.bfloat16)

    h2 = jnp.dot(h1, w2_ref[...], preferred_element_type=jnp.float32) + b2_ref[...]
    h2 = jnp.maximum(h2, 0.0).astype(jnp.bfloat16)

    out = jnp.dot(h2, w3_ref[...], preferred_element_type=jnp.float32) + b3_ref[...]
    o_ref[...] = out.astype(o_ref.dtype)


def _vmem_capacity_bytes():
    try:
        return int(pltpu.get_tpu_info().vmem_capacity_bytes)
    except Exception:
        return 64 * _MiB  # conservative default (v7x per-TC capacity)


def prepare_params(params):
    """One-time: cast weights to bf16 and pad the hidden dim to 128 lanes.

    Runs once at init (NOT per forward). Zero-padded hidden columns/rows are
    exact no-ops through ReLU + the next matmul, so the math matches nn.Linear.
    """
    w1, b1, w2, b2, w3, b3 = (params["w1"], params["b1"], params["w2"],
                              params["b2"], params["w3"], params["b3"])
    d_in, hidden = w1.shape
    d_out = w3.shape[1]
    hid_p = _round_up(hidden, LANE)
    bf = jnp.bfloat16
    f32 = jnp.float32
    return {
        "d_in": int(d_in), "hidden": int(hidden), "hid_p": int(hid_p), "d_out": int(d_out),
        "w1": jnp.zeros((d_in, hid_p), bf).at[:, :hidden].set(w1.astype(bf)),
        "b1": jnp.zeros((1, hid_p), f32).at[:, :hidden].set(b1.reshape(1, -1).astype(f32)),
        "w2": jnp.zeros((hid_p, hid_p), bf).at[:hidden, :hidden].set(w2.astype(bf)),
        "b2": jnp.zeros((1, hid_p), f32).at[:, :hidden].set(b2.reshape(1, -1).astype(f32)),
        "w3": jnp.zeros((hid_p, d_out), bf).at[:hidden, :].set(w3.astype(bf)),
        "b3": b3.reshape(1, -1).astype(f32),
    }


# TODO(synk): for hidden dims whose bf16 weights exceed the VMEM budget (v7x's
# 64 MiB/TC hits this first), add a K/N feature-tiled grid axis with an f32
# scratch accumulator instead of requiring whole-weight residency.
def _build_call(rows, tb, d_in, hid_p, d_out, vmem_limit, cost, single_buffer_weights):
    def const_spec(shape):
        if single_buffer_weights:
            # Constant index_map -> never re-fetched across the grid; one buffer
            # suffices and halves resident-weight VMEM (key lever on v7x).
            return pl.BlockSpec(shape, lambda i: (0,) * len(shape),
                                pipeline_mode=pl.Buffered(buffer_count=1))
        return pl.BlockSpec(shape, lambda i: (0,) * len(shape))

    return pl.pallas_call(
        _encoder_kernel,
        out_shape=jax.ShapeDtypeStruct((rows, d_out), jnp.float32),
        grid=(pl.cdiv(rows, tb),),
        in_specs=[
            pl.BlockSpec((tb, d_in), lambda i: (i, 0)),       # x: streamed f32 tiles
            const_spec((d_in, hid_p)), const_spec((1, hid_p)),
            const_spec((hid_p, hid_p)), const_spec((1, hid_p)),
            const_spec((hid_p, d_out)), const_spec((1, d_out)),
        ],
        out_specs=pl.BlockSpec((tb, d_out), lambda i: (i, 0)),
        compiler_params=pltpu.CompilerParams(
            dimension_semantics=("parallel",),
            vmem_limit_bytes=vmem_limit,
        ),
        cost_estimate=cost,
    )


def data_encoder_forward(x, prep, *, batch_tile=None):
    """x: (batch, input_dim) f32. prep: output of prepare_params()."""
    batch, d_in = x.shape
    assert d_in == prep["d_in"], "input feature dim mismatch"
    hid_p, d_out = prep["hid_p"], prep["d_out"]

    vmem_cap = _vmem_capacity_bytes()
    if batch_tile is None:
        # 512-row tiles on 128-MiB-VMEM chips (v5e/v6e); 256 on v7x where the
        # two TensorCores each hold their own weight copy under "parallel".
        batch_tile = 512 if vmem_cap >= 96 * _MiB else 256
    batch_tile = max(16, _round_up(batch_tile, 16))

    # bf16 sublane packing: keep tiles a multiple of 16 rows. Only misaligned /
    # tiny batches get a (cheap) pad copy; aligned batches stream as-is and
    # ragged last tiles rely on Pallas edge masking.
    rows = batch if batch % 16 == 0 else _round_up(batch, 16)
    x_in = x if rows == batch else jnp.zeros((rows, d_in), x.dtype).at[:batch].set(x)
    tb = min(batch_tile, rows)

    # VMEM budget, including f32 h1/h2 intermediates + bf16 recasts that live in
    # compiler scratch (64 vregs only hold 256 KiB), with a fallback 2x on the
    # weights in case the single-buffer request is rejected.
    w_bytes = (d_in * hid_p + hid_p * hid_p + hid_p * d_out) * 2
    b_bytes = (2 * hid_p + d_out) * 4
    act_bytes = 2 * tb * d_in * 4 + 2 * tb * d_out * 4            # double-buffered x / out tiles
    tmp_bytes = tb * d_in * 2 + 2 * tb * hid_p * (4 + 2) + tb * d_out * 4
    need = int(1.3 * (2 * w_bytes + 2 * b_bytes + act_bytes + tmp_bytes)) + 2 * _MiB
    usable = max(vmem_cap - 16 * _MiB, 32 * _MiB)
    vmem_limit = int(min(max(need, 32 * _MiB), usable))

    flops = 2 * rows * (d_in * hid_p + hid_p * hid_p + hid_p * d_out)
    bytes_accessed = x_in.size * 4 + w_bytes + b_bytes + rows * d_out * 4
    cost = pl.CostEstimate(flops=flops, transcendentals=0, bytes_accessed=bytes_accessed)

    args = (x_in, prep["w1"], prep["b1"], prep["w2"], prep["b2"], prep["w3"], prep["b3"])
    out = None
    for single_buf in (True, False):
        try:
            call = _build_call(rows, tb, d_in, hid_p, d_out, vmem_limit, cost, single_buf)
            out = jax.block_until_ready(call(*args))
            break
        except Exception:
            if not single_buf:
                raise
    return out if rows == batch else out[:batch]


def init_params(key, input_dim, output_dim, hidden_dim):
    """Shapes mirror nn.Linear(input,hidden) -> nn.Linear(hidden,hidden) ->
    nn.Linear(hidden,output); weights stored transposed as (in, out)."""
    k1, k2, k3, k4, k5, k6 = jax.random.split(key, 6)

    def uinit(k, fan_in, shape):
        bound = 1.0 / jnp.sqrt(fan_in)
        return jax.random.uniform(k, shape, jnp.float32, -bound, bound)

    return {
        "w1": uinit(k1, input_dim, (input_dim, hidden_dim)),
        "b1": uinit(k2, input_dim, (1, hidden_dim)),
        "w2": uinit(k3, hidden_dim, (hidden_dim, hidden_dim)),
        "b2": uinit(k4, hidden_dim, (1, hidden_dim)),
        "w3": uinit(k5, hidden_dim, (hidden_dim, output_dim)),
        "b3": uinit(k6, hidden_dim, (1, output_dim)),
    }


def reference_forward(x, params):
    # Mirrors the kernel's numerics: bf16 matmul operands, f32 accumulation,
    # bias-add + ReLU in f32.
    bf = jnp.bfloat16
    h1 = jnp.maximum(
        jnp.dot(x.astype(bf), params["w1"].astype(bf),
                preferred_element_type=jnp.float32) + params["b1"], 0.0)
    h2 = jnp.maximum(
        jnp.dot(h1.astype(bf), params["w2"].astype(bf),
                preferred_element_type=jnp.float32) + params["b2"], 0.0)
    return jnp.dot(h2.astype(bf), params["w3"].astype(bf),
                   preferred_element_type=jnp.float32) + params["b3"]


if __name__ == "__main__":
    batch = 8
    input_dim = 16
    hidden_dim = 32
    output_dim = 8

    key = jax.random.PRNGKey(0)
    kx, kp = jax.random.split(key)
    x = jax.random.normal(kx, (batch, input_dim), dtype=jnp.float32)
    params = init_params(kp, input_dim, output_dim, hidden_dim)

    # One-time weight padding / bf16 cast (out of the hot path).
    prep = prepare_params(params)

    out = data_encoder_forward(x, prep)
    out = jax.block_until_ready(out)

    ref = reference_forward(x, params)
    assert out.shape == (batch, output_dim)
    assert jnp.allclose(out, ref, atol=2e-2, rtol=2e-2), "mismatch vs reference"

    print("KERNEL_OK")
</pallas_src>

<mosaic_0001>
module attributes {stable_mosaic.version = 11 : i64} {
  func.func @_encoder_kernel(%arg0: i32, %arg1: memref<16x16xf32, #tpu.memory_space<vmem>>, %arg2: memref<16x128xbf16, #tpu.memory_space<vmem>>, %arg3: memref<1x128xf32, #tpu.memory_space<vmem>>, %arg4: memref<128x128xbf16, #tpu.memory_space<vmem>>, %arg5: memref<1x128xf32, #tpu.memory_space<vmem>>, %arg6: memref<128x8xbf16, #tpu.memory_space<vmem>>, %arg7: memref<1x8xf32, #tpu.memory_space<vmem>>, %arg8: memref<16x8xf32, #tpu.memory_space<vmem>>) attributes {dimension_semantics = [#tpu.dimension_semantics<parallel>], iteration_bounds = array<i64: 1>, scalar_prefetch = 0 : i64, scratch_operands = 0 : i64, tpu.core_type = #tpu.core_type<tc>, window_params = [{transform_indices = @transform_0, window_bounds = array<i64: 16, 16>}, {pipeline_mode = #tpu.pipeline_mode<synchronous>, transform_indices = @transform_1, window_bounds = array<i64: 16, 128>}, {pipeline_mode = #tpu.pipeline_mode<synchronous>, transform_indices = @transform_2, window_bounds = array<i64: 1, 128>}, {pipeline_mode = #tpu.pipeline_mode<synchronous>, transform_indices = @transform_3, window_bounds = array<i64: 128, 128>}, {pipeline_mode = #tpu.pipeline_mode<synchronous>, transform_indices = @transform_4, window_bounds = array<i64: 1, 128>}, {pipeline_mode = #tpu.pipeline_mode<synchronous>, transform_indices = @transform_5, window_bounds = array<i64: 128, 8>}, {pipeline_mode = #tpu.pipeline_mode<synchronous>, transform_indices = @transform_6, window_bounds = array<i64: 1, 8>}, {transform_indices = @transform_7, window_bounds = array<i64: 16, 8>}]} {
    %c0 = arith.constant 0 : index
    %c0_0 = arith.constant 0 : index
    %0 = vector.load %arg1[%c0, %c0_0] : memref<16x16xf32, #tpu.memory_space<vmem>>, vector<16x16xf32>
    %1 = arith.truncf %0 : vector<16x16xf32> to vector<16x16xbf16>
    %c0_1 = arith.constant 0 : index
    %c0_2 = arith.constant 0 : index
    %2 = vector.load %arg2[%c0_1, %c0_2] : memref<16x128xbf16, #tpu.memory_space<vmem>>, vector<16x128xbf16>
    %cst = arith.constant dense<0.000000e+00> : vector<16x128xf32>
    %3 = tpu.matmul %1, %2, %cst {dimension_numbers = #tpu.dot_dimension_numbers<[1], [0], [0], [1], [0, 0, 1, 1], [], []>} : vector<16x16xbf16>, vector<16x128xbf16>, vector<16x128xf32> -> vector<16x128xf32>
    %c0_3 = arith.constant 0 : index
    %c0_4 = arith.constant 0 : index
    %4 = vector.load %arg3[%c0_3, %c0_4] : memref<1x128xf32, #tpu.memory_space<vmem>>, vector<1x128xf32>
    %5 = vector.broadcast %4 : vector<1x128xf32> to vector<16x128xf32>
    %6 = arith.addf %3, %5 : vector<16x128xf32>
    %cst_5 = arith.constant 0.000000e+00 : f32
    %7 = vector.broadcast %cst_5 : f32 to vector<16x128xf32>
    %8 = arith.maximumf %6, %7 : vector<16x128xf32>
    %9 = arith.truncf %8 : vector<16x128xf32> to vector<16x128xbf16>
    %c0_6 = arith.constant 0 : index
    %c0_7 = arith.constant 0 : index
    %10 = vector.load %arg4[%c0_6, %c0_7] : memref<128x128xbf16, #tpu.memory_space<vmem>>, vector<128x128xbf16>
    %cst_8 = arith.constant dense<0.000000e+00> : vector<16x128xf32>
    %11 = tpu.matmul %9, %10, %cst_8 {dimension_numbers = #tpu.dot_dimension_numbers<[1], [0], [0], [1], [0, 0, 1, 1], [], []>} : vector<16x128xbf16>, vector<128x128xbf16>, vector<16x128xf32> -> vector<16x128xf32>
    %c0_9 = arith.constant 0 : index
    %c0_10 = arith.constant 0 : index
    %12 = vector.load %arg5[%c0_9, %c0_10] : memref<1x128xf32, #tpu.memory_space<vmem>>, vector<1x128xf32>
    %13 = vector.broadcast %12 : vector<1x128xf32> to vector<16x128xf32>
    %14 = arith.addf %11, %13 : vector<16x128xf32>
    %cst_11 = arith.constant 0.000000e+00 : f32
    %15 = vector.broadcast %cst_11 : f32 to vector<16x128xf32>
    %16 = arith.maximumf %14, %15 : vector<16x128xf32>
    %17 = arith.truncf %16 : vector<16x128xf32> to vector<16x128xbf16>
    %c0_12 = arith.constant 0 : index
    %c0_13 = arith.constant 0 : index
    %18 = vector.load %arg6[%c0_12, %c0_13] : memref<128x8xbf16, #tpu.memory_space<vmem>>, vector<128x8xbf16>
    %cst_14 = arith.constant dense<0.000000e+00> : vector<16x8xf32>
    %19 = tpu.matmul %17, %18, %cst_14 {dimension_numbers = #tpu.dot_dimension_numbers<[1], [0], [0], [1], [0, 0, 1, 1], [], []>} : vector<16x128xbf16>, vector<128x8xbf16>, vector<16x8xf32> -> vector<16x8xf32>
    %c0_15 = arith.constant 0 : index
    %c0_16 = arith.constant 0 : index
    %20 = vector.load %arg7[%c0_15, %c0_16] : memref<1x8xf32, #tpu.memory_space<vmem>>, vector<1x8xf32>
    %21 = vector.broadcast %20 : vector<1x8xf32> to vector<16x8xf32>
    %22 = arith.addf %19, %21 : vector<16x8xf32>
    %c0_17 = arith.constant 0 : index
    %c0_18 = arith.constant 0 : index
    %23 = vector.load %arg8[%c0_17, %c0_18] : memref<16x8xf32, #tpu.memory_space<vmem>>, vector<16x8xf32>
    tpu.vector_store %arg8[%c0_17, %c0_18], %22 {strides = array<i32>} : memref<16x8xf32, #tpu.memory_space<vmem>>, vector<16x8xf32>,
    return
  }
  func.func @transform_0(%arg0: i32) -> (i32, i32) {
    %c0_i32 = arith.constant 0 : i32
    %c0_i32_0 = arith.constant 0 : i32
    return %arg0, %c0_i32 : i32, i32
  }
  func.func @transform_1(%arg0: i32) -> (i32, i32) {
    %c0_i32 = arith.constant 0 : i32
    %c0_i32_0 = arith.constant 0 : i32
    %c0_i32_1 = arith.constant 0 : i32
    return %c0_i32, %c0_i32_0 : i32, i32
  }
  func.func @transform_2(%arg0: i32) -> (i32, i32) {
    %c0_i32 = arith.constant 0 : i32
    %c0_i32_0 = arith.constant 0 : i32
    %c0_i32_1 = arith.constant 0 : i32
    return %c0_i32, %c0_i32_0 : i32, i32
  }
  func.func @transform_3(%arg0: i32) -> (i32, i32) {
    %c0_i32 = arith.constant 0 : i32
    %c0_i32_0 = arith.constant 0 : i32
    %c0_i32_1 = arith.constant 0 : i32
    return %c0_i32, %c0_i32_0 : i32, i32
  }
  func.func @transform_4(%arg0: i32) -> (i32, i32) {
    %c0_i32 = arith.constant 0 : i32
    %c0_i32_0 = arith.constant 0 : i32
    %c0_i32_1 = arith.constant 0 : i32
    return %c0_i32, %c0_i32_0 : i32, i32
  }
  func.func @transform_5(%arg0: i32) -> (i32, i32) {
    %c0_i32 = arith.constant 0 : i32
    %c0_i32_0 = arith.constant 0 : i32
    %c0_i32_1 = arith.constant 0 : i32
    return %c0_i32, %c0_i32_0 : i32, i32
  }
  func.func @transform_6(%arg0: i32) -> (i32, i32) {
    %c0_i32 = arith.constant 0 : i32
    %c0_i32_0 = arith.constant 0 : i32
    %c0_i32_1 = arith.constant 0 : i32
    return %c0_i32, %c0_i32_0 : i32, i32
  }
  func.func @transform_7(%arg0: i32) -> (i32, i32) {
    %c0_i32 = arith.constant 0 : i32
    %c0_i32_0 = arith.constant 0 : i32
    return %arg0, %c0_i32 : i32, i32
  }
}

module attributes {stable_mosaic.version = 11 : i64} {
  func.func @_encoder_kernel(%arg0: i32, %arg1: memref<16x16xf32, #tpu.memory_space<vmem>>, %arg2: memref<16x128xbf16, #tpu.memory_space<vmem>>, %arg3: memref<1x128xf32, #tpu.memory_space<vmem>>, %arg4: memref<128x128xbf16, #tpu.memory_space<vmem>>, %arg5: memref<1x128xf32, #tpu.memory_space<vmem>>, %arg6: memref<128x8xbf16, #tpu.memory_space<vmem>>, %arg7: memref<1x8xf32, #tpu.memory_space<vmem>>, %arg8: memref<16x8xf32, #tpu.memory_space<vmem>>) attributes {dimension_semantics = [#tpu.dimension_semantics<parallel>], iteration_bounds = array<i64: 1>, scalar_prefetch = 0 : i64, scratch_operands = 0 : i64, tpu.core_type = #tpu.core_type<tc>, window_params = [{transform_indices = @transform_0, window_bounds = array<i64: 16, 16>}, {pipeline_mode = #tpu.pipeline_mode<synchronous>, transform_indices = @transform_1, window_bounds = array<i64: 16, 128>}, {pipeline_mode = #tpu.pipeline_mode<synchronous>, transform_indices = @transform_2, window_bounds = array<i64: 1, 128>}, {pipeline_mode = #tpu.pipeline_mode<synchronous>, transform_indices = @transform_3, window_bounds = array<i64: 128, 128>}, {pipeline_mode = #tpu.pipeline_mode<synchronous>, transform_indices = @transform_4, window_bounds = array<i64: 1, 128>}, {pipeline_mode = #tpu.pipeline_mode<synchronous>, transform_indices = @transform_5, window_bounds = array<i64: 128, 8>}, {pipeline_mode = #tpu.pipeline_mode<synchronous>, transform_indices = @transform_6, window_bounds = array<i64: 1, 8>}, {transform_indices = @transform_7, window_bounds = array<i64: 16, 8>}]} {
    %c0 = arith.constant 0 : index
    %c0_0 = arith.constant 0 : index
    %0 = vector.load %arg1[%c0, %c0_0] : memref<16x16xf32, #tpu.memory_space<vmem>>, vector<16x16xf32>
    %1 = arith.truncf %0 : vector<16x16xf32> to vector<16x16xbf16>
    %c0_1 = arith.constant 0 : index
    %c0_2 = arith.constant 0 : index
    %2 = vector.load %arg2[%c0_1, %c0_2] : memref<16x128xbf16, #tpu.memory_space<vmem>>, vector<16x128xbf16>
    %cst = arith.constant dense<0.000000e+00> : vector<16x128xf32>
    %3 = tpu.matmul %1, %2, %cst {dimension_numbers = #tpu.dot_dimension_numbers<[1], [0], [0], [1], [0, 0, 1, 1], [], []>} : vector<16x16xbf16>, vector<16x128xbf16>, vector<16x128xf32> -> vector<16x128xf32>
    %c0_3 = arith.constant 0 : index
    %c0_4 = arith.constant 0 : index
    %4 = vector.load %arg3[%c0_3, %c0_4] : memref<1x128xf32, #tpu.memory_space<vmem>>, vector<1x128xf32>
    %5 = vector.broadcast %4 : vector<1x128xf32> to vector<16x128xf32>
    %6 = arith.addf %3, %5 : vector<16x128xf32>
    %cst_5 = arith.constant 0.000000e+00 : f32
    %7 = vector.broadcast %cst_5 : f32 to vector<16x128xf32>
    %8 = arith.maximumf %6, %7 : vector<16x128xf32>
    %9 = arith.truncf %8 : vector<16x128xf32> to vector<16x128xbf16>
    %c0_6 = arith.constant 0 : index
    %c0_7 = arith.constant 0 : index
    %10 = vector.load %arg4[%c0_6, %c0_7] : memref<128x128xbf16, #tpu.memory_space<vmem>>, vector<128x128xbf16>
    %cst_8 = arith.constant dense<0.000000e+00> : vector<16x128xf32>
    %11 = tpu.matmul %9, %10, %cst_8 {dimension_numbers = #tpu.dot_dimension_numbers<[1], [0], [0], [1], [0, 0, 1, 1], [], []>} : vector<16x128xbf16>, vector<128x128xbf16>, vector<16x128xf32> -> vector<16x128xf32>
    %c0_9 = arith.constant 0 : index
    %c0_10 = arith.constant 0 : index
    %12 = vector.load %arg5[%c0_9, %c0_10] : memref<1x128xf32, #tpu.memory_space<vmem>>, vector<1x128xf32>
    %13 = vector.broadcast %12 : vector<1x128xf32> to vector<16x128xf32>
    %14 = arith.addf %11, %13 : vector<16x128xf32>
    %cst_11 = arith.constant 0.000000e+00 : f32
    %15 = vector.broadcast %cst_11 : f32 to vector<16x128xf32>
    %16 = arith.maximumf %14, %15 : vector<16x128xf32>
    %17 = arith.truncf %16 : vector<16x128xf32> to vector<16x128xbf16>
    %c0_12 = arith.constant 0 : index
    %c0_13 = arith.constant 0 : index
    %18 = vector.load %arg6[%c0_12, %c0_13] : memref<128x8xbf16, #tpu.memory_space<vmem>>, vector<128x8xbf16>
    %cst_14 = arith.constant dense<0.000000e+00> : vector<16x8xf32>
    %19 = tpu.matmul %17, %18, %cst_14 {dimension_numbers = #tpu.dot_dimension_numbers<[1], [0], [0], [1], [0, 0, 1, 1], [], []>} : vector<16x128xbf16>, vector<128x8xbf16>, vector<16x8xf32> -> vector<16x8xf32>
    %c0_15 = arith.constant 0 : index
    %c0_16 = arith.constant 0 : index
    %20 = vector.load %arg7[%c0_15, %c0_16] : memref<1x8xf32, #tpu.memory_space<vmem>>, vector<1x8xf32>
    %21 = vector.broadcast %20 : vector<1x8xf32> to vector<16x8xf32>
    %22 = arith.addf %19, %21 : vector<16x8xf32>
    %c0_17 = arith.constant 0 : index
    %c0_18 = arith.constant 0 : index
    %23 = vector.load %arg8[%c0_17, %c0_18] : memref<16x8xf32, #tpu.memory_space<vmem>>, vector<16x8xf32>
    tpu.vector_store %arg8[%c0_17, %c0_18], %22 {strides = array<i32>} : memref<16x8xf32, #tpu.memory_space<vmem>>, vector<16x8xf32>,
    return
  }
  func.func @transform_0(%arg0: i32) -> (i32, i32) {
    %c0_i32 = arith.constant 0 : i32
    %c0_i32_0 = arith.constant 0 : i32
    return %arg0, %c0_i32 : i32, i32
  }
  func.func @transform_1(%arg0: i32) -> (i32, i32) {
    %c0_i32 = arith.constant 0 : i32
    %c0_i32_0 = arith.constant 0 : i32
    %c0_i32_1 = arith.constant 0 : i32
    return %c0_i32, %c0_i32_0 : i32, i32
  }
  func.func @transform_2(%arg0: i32) -> (i32, i32) {
    %c0_i32 = arith.constant 0 : i32
    %c0_i32_0 = arith.constant 0 : i32
    %c0_i32_1 = arith.constant 0 : i32
    return %c0_i32, %c0_i32_0 : i32, i32
  }
  func.func @transform_3(%arg0: i32) -> (i32, i32) {
    %c0_i32 = arith.constant 0 : i32
    %c0_i32_0 = arith.constant 0 : i32
    %c0_i32_1 = arith.constant 0 : i32
    return %c0_i32, %c0_i32_0 : i32, i32
  }
  func.func @transform_4(%arg0: i32) -> (i32, i32) {
    %c0_i32 = arith.constant 0 : i32
    %c0_i32_0 = arith.constant 0 : i32
    %c0_i32_1 = arith.constant 0 : i32
    return %c0_i32, %c0_i32_0 : i32, i32
  }
  func.func @transform_5(%arg0: i32) -> (i32, i32) {
    %c0_i32 = arith.constant 0 : i32
    %c0_i32_0 = arith.constant 0 : i32
    %c0_i32_1 = arith.constant 0 : i32
    return %c0_i32, %c0_i32_0 : i32, i32
  }
  func.func @transform_6(%arg0: i32) -> (i32, i32) {
    %c0_i32 = arith.constant 0 : i32
    %c0_i32_0 = arith.constant 0 : i32
    %c0_i32_1 = arith.constant 0 : i32
    return %c0_i32, %c0_i32_0 : i32, i32
  }
  func.func @transform_7(%arg0: i32) -> (i32, i32) {
    %c0_i32 = arith.constant 0 : i32
    %c0_i32_0 = arith.constant 0 : i32
    return %arg0, %c0_i32 : i32, i32
  }
}

</mosaic_0001>

<llo_original>
// kernel: tpu_custom_call.1
$region0: #{tpu_custom_call.1}
  #allocation0 [shape = 'u32[]', space=smem, size = 0x4, offset = 0x4, fixed_abs, tag = 'smem constant byte address 0x4 - core index']
  #allocation1 [shape = 'u32[144,128]{1,0:T(1,128)}', space=vmem, size = 0x12000, scoped, tag = 'internal scratch']
  %s0 = inlined_call_operand.hbm [shape: f32[16,16], index: 0, kind: input, shape index: {}]
  %s1 = inlined_call_operand.vmem [shape: bf16[16,128], index: 1, kind: input, shape index: {}]
  %s2 = inlined_call_operand.vmem [shape: f32[1,128], index: 2, kind: input, shape index: {}]
  %s3 = inlined_call_operand.vmem [shape: bf16[128,128], index: 3, kind: input, shape index: {}]
  %s4 = inlined_call_operand.hbm [shape: f32[1,128], index: 4, kind: input, shape index: {}]
  %s5 = inlined_call_operand.vmem [shape: bf16[128,8], index: 5, kind: input, shape index: {}]
  %s6 = inlined_call_operand.vmem [shape: f32[1,8], index: 6, kind: input, shape index: {}]
  %s7 = inlined_call_operand.vmem [shape: f32[16,8], index: 7, kind: output, shape index: {}]
  %s8 = sld [smem:[#allocation0]]
  $region46: #{tpu_custom_call.1} parent=0
    _
  %s10 = ssub.s32 1, %s8
  %s11 = scalar_select 0, %s10, %s8
  $region1: #{tpu_custom_call.1} parent=0
    #allocation2 [shape = 'u8[8192]{0}', space=vmem, size = 0x2000, scoped, tag = 'input window, operand 0, single buffered']
    #allocation3 [shape = 's32[1]{0}', space=sflag, size = 0x4, scoped, tag = 'scoped memory for tpu_custom_call.1']
    #allocation4 [shape = 'u8[512]{0}', space=vmem, size = 0x400, scoped, tag = 'input window, operand 4, single buffered']
    #allocation5 [shape = 's32[1]{0}', space=sflag, size = 0x4, scoped, tag = 'scoped memory for tpu_custom_call.1']
    %12 = vsyncpa [#allocation3], 0
    %13 = vsyncpa [#allocation5], 0
    // Predicated region
    $region2: #{tpu_custom_call.1} parent=1 // pred_check
      _
    $region3: #{tpu_custom_call.1} parent=1 // pred_check_branch
      %15 = sbr.rel (0) target = $region5
    $region4: #{tpu_custom_call.1} parent=1 // pred_region
      %s17 = ssub.s32 256, 256
      %18 = vsyncadd [#allocation3], %s17
      %s19 = sshll.u32 [#allocation2], 4
      %s20 = int_to_ptr.vmem [resolvable:$true] %s19
      %25 = dma.hbm_to_vmem [thread:$0]  %s0, 256, %s20, [#allocation3], 128, 128, 8
    $region5: #{tpu_custom_call.1} parent=1 // pred_fallthru
      _
    // Predicated region
    $region6: #{tpu_custom_call.1} parent=1 // pred_check
      _
    $region7: #{tpu_custom_call.1} parent=1 // pred_check_branch
      %27 = sbr.rel (0) target = $region9
    $region8: #{tpu_custom_call.1} parent=1 // pred_region
      _
    $region9: #{tpu_custom_call.1} parent=1 // pred_fallthru
      _
    // Predicated region
    $region10: #{tpu_custom_call.1} parent=1 // pred_check
      _
    $region11: #{tpu_custom_call.1} parent=1 // pred_check_branch
      %29 = sbr.rel (0) target = $region13
    $region12: #{tpu_custom_call.1} parent=1 // pred_region
      _
    $region13: #{tpu_custom_call.1} parent=1 // pred_fallthru
      _
    // Predicated region
    $region14: #{tpu_custom_call.1} parent=1 // pred_check
      _
    $region15: #{tpu_custom_call.1} parent=1 // pred_check_branch
      %31 = sbr.rel (0) target = $region17
    $region16: #{tpu_custom_call.1} parent=1 // pred_region
      _
    $region17: #{tpu_custom_call.1} parent=1 // pred_fallthru
      _
    // Predicated region
    $region18: #{tpu_custom_call.1} parent=1 // pred_check
      _
    $region19: #{tpu_custom_call.1} parent=1 // pred_check_branch
      %33 = sbr.rel (0) target = $region21
    $region20: #{tpu_custom_call.1} parent=1 // pred_region
      %s35 = ssub.s32 16, 16
      %36 = vsyncadd [#allocation5], %s35
      %s38 = sshll.u32 [#allocation4], 4
      %s39 = int_to_ptr.vmem [resolvable:$true] %s38
      %41 = dma.hbm_to_vmem [thread:$0]  %s4, 16, %s39, [#allocation5]
    $region21: #{tpu_custom_call.1} parent=1 // pred_fallthru
      _
    // Predicated region
    $region22: #{tpu_custom_call.1} parent=1 // pred_check
      _
    $region23: #{tpu_custom_call.1} parent=1 // pred_check_branch
      %43 = sbr.rel (0) target = $region25
    $region24: #{tpu_custom_call.1} parent=1 // pred_region
      _
    $region25: #{tpu_custom_call.1} parent=1 // pred_fallthru
      _
    // Predicated region
    $region26: #{tpu_custom_call.1} parent=1 // pred_check
      _
    $region27: #{tpu_custom_call.1} parent=1 // pred_check_branch
      %45 = sbr.rel (0) target = $region29
    $region28: #{tpu_custom_call.1} parent=1 // pred_region
      _
    $region29: #{tpu_custom_call.1} parent=1 // pred_fallthru
      _
    // Predicated region
    $region30: #{tpu_custom_call.1} parent=1 // pred_check
      _
    $region31: #{tpu_custom_call.1} parent=1 // pred_check_branch
      %47 = sbr.rel (0) target = $region33
    $region32: #{tpu_custom_call.1} parent=1 // pred_region
      %48 = dma.done [#allocation3], 256
    $region33: #{tpu_custom_call.1} parent=1 // pred_fallthru
      _
    // Predicated region
    $region34: #{tpu_custom_call.1} parent=1 // pred_check
      _
    $region35: #{tpu_custom_call.1} parent=1 // pred_check_branch
      %50 = sbr.rel (0) target = $region37
    $region36: #{tpu_custom_call.1} parent=1 // pred_region
      %51 = dma.done [#allocation5], 16
    $region37: #{tpu_custom_call.1} parent=1 // pred_fallthru
      _
    %v53 = vld [vmem:[#allocation2] sm:$0xff]
    %v54 = vld [vmem:[#allocation2 + $0x8] sm:$0xff]
    %v55 = vpack.c.bf16 %v54, %v53
    %v56 = vld [vmem:[%s1] sm:$0xf]
    %v57 = vld [vmem:[%s1 + $0x4] sm:$0xf]
    %v58 = vld [vmem:[%s2] sm:$0x1]
    %v60 = vlaneseq
    %v61 = vshrl.u32 %v60, 7
    %v62 = vsub.s32 0, %v61
    %v63 = vrot.slane %v58, %v62
    %v67 = vunpack.c.l.b16 %v56
    %v68 = vunpack.c.l.b16 %v57
    %v69 = vpack.c.b16 %v68, %v67
    %vm71 = vcmask 130048
    %v73 = vsel %vm71, %v55, 0
    %75 = vmatprep.subr.bf16.mxu0 0
    %76 = vmatpush1.bf16.msra.mxu0 0
    %77 = vmatprep.subr.bf16.mxu0 0
    %78 = vmatpush1.bf16.msra.mxu0 0
    %79 = vmatprep.subr.bf16.mxu0 0
    %80 = vmatpush1.bf16.msra.mxu0 0
    %81 = vmatprep.subr.bf16.mxu0 0
    %82 = vmatpush1.bf16.msra.mxu0 0
    %83 = vmatprep.subr.bf16.mxu0 0
    %84 = vmatpush1.bf16.msra.mxu0 0
    %85 = vmatprep.subr.bf16.mxu0 0
    %86 = vmatpush1.bf16.msra.mxu0 0
    %87 = vmatprep.subr.bf16.mxu0 0
    %88 = vmatpush1.bf16.msra.mxu0 0
    %89 = vmatprep.subr.bf16.mxu0 0
    %90 = vmatpush1.bf16.msra.mxu0 %v69
    %91 = vmatprep.subr.bf16.mxu0 0
    %92 = vmatpush2.bf16.msra.mxu0 0
    %93 = vmatprep.subr.bf16.mxu0 0
    %94 = vmatpush2.bf16.msra.mxu0 0
    %95 = vmatprep.subr.bf16.mxu0 0
    %96 = vmatpush2.bf16.msra.mxu0 0
    %97 = vmatprep.subr.bf16.mxu0 0
    %98 = vmatpush2.bf16.msra.mxu0 0
    %99 = vmatprep.subr.bf16.mxu0 0
    %100 = vmatpush2.bf16.msra.mxu0 0
    %101 = vmatprep.subr.bf16.mxu0 0
    %102 = vmatpush2.bf16.msra.mxu0 0
    %103 = vmatprep.subr.bf16.mxu0 0
    %104 = vmatpush2.bf16.msra.mxu0 0
    %105 = vmatprep.subr.bf16.mxu0 0
    %106 = vmatpush2.bf16.msra.mxu0 0
    %107 = vmatprep.mubr.bf16.mxu0 0
    %108 = vmatmul.mubr.bf16.gmra.mxu0 %v73
    %v109 = vpop.f32.mrf.mxu0
    %v110 = vadd.f32 %v63, %v109
    %v111 = vpop.f32.mrf.mxu0
    %v112 = vpop.f32.mrf.mxu0
    %v113 = vadd.f32 %v63, %v112
    %v114 = vpop.f32.mrf.mxu0
    %115 = vdwg.mxu0
    %v116 = vmax.f32 %v110, 0.0
    %v117 = vmax.f32 %v113, 0.0
    %v118 = vpack.c.bf16 %v117, %v116
    %v119 = vld [vmem:[%s3] sm:$0xf]
    %v120 = vld [vmem:[%s3 + $0x4] sm:$0xf]
    %v121 = vld [vmem:[%s3 + $0x8] sm:$0xf]
    %v122 = vld [vmem:[%s3 + $0xc] sm:$0xf]
    %v123 = vld [vmem:[%s3 + $0x10] sm:$0xf]
    %v124 = vld [vmem:[%s3 + $0x14] sm:$0xf]
    %v125 = vld [vmem:[%s3 + $0x18] sm:$0xf]
    %v126 = vld [vmem:[%s3 + $0x1c] sm:$0xf]
    %v127 = vld [vmem:[%s3 + $0x20] sm:$0xf]
    %v128 = vld [vmem:[%s3 + $0x24] sm:$0xf]
    %v129 = vld [vmem:[%s3 + $0x28] sm:$0xf]
    %v130 = vld [vmem:[%s3 + $0x2c] sm:$0xf]
    %v131 = vld [vmem:[%s3 + $0x30] sm:$0xf]
    %v132 = vld [vmem:[%s3 + $0x34] sm:$0xf]
    %v133 = vld [vmem:[%s3 + $0x38] sm:$0xf]
    %v134 = vld [vmem:[%s3 + $0x3c] sm:$0xf]
    %v135 = vld [vmem:[#allocation4] sm:$0x1]
    %v137 = vlaneseq
    %v138 = vshrl.u32 %v137, 7
    %v139 = vsub.s32 0, %v138
    %v140 = vrot.slane %v135, %v139
    %v158 = vunpack.c.l.b16 %v119
    %v159 = vunpack.c.l.b16 %v120
    %v160 = vunpack.c.l.b16 %v121
    %v161 = vunpack.c.l.b16 %v122
    %v162 = vunpack.c.l.b16 %v123
    %v163 = vunpack.c.l.b16 %v124
    %v164 = vunpack.c.l.b16 %v125
    %v165 = vunpack.c.l.b16 %v126
    %v166 = vunpack.c.l.b16 %v127
    %v167 = vunpack.c.l.b16 %v128
    %v168 = vunpack.c.l.b16 %v129
    %v169 = vunpack.c.l.b16 %v130
    %v170 = vunpack.c.l.b16 %v131
    %v171 = vunpack.c.l.b16 %v132
    %v172 = vunpack.c.l.b16 %v133
    %v173 = vunpack.c.l.b16 %v134
    %v174 = vpack.c.b16 %v159, %v158
    %v175 = vpack.c.b16 %v161, %v160
    %v176 = vpack.c.b16 %v163, %v162
    %v177 = vpack.c.b16 %v165, %v164
    %v178 = vpack.c.b16 %v167, %v166
    %v179 = vpack.c.b16 %v169, %v168
    %v180 = vpack.c.b16 %v171, %v170
    %v181 = vpack.c.b16 %v173, %v172
    %190 = vmatprep.subr.bf16.mxu0 0
    %191 = vmatpush1.bf16.msra.mxu0 %v181
    %192 = vmatprep.subr.bf16.mxu0 0
    %193 = vmatpush1.bf16.msra.mxu0 %v180
    %194 = vmatprep.subr.bf16.mxu0 0
    %195 = vmatpush1.bf16.msra.mxu0 %v179
    %196 = vmatprep.subr.bf16.mxu0 0
    %197 = vmatpush1.bf16.msra.mxu0 %v178
    %198 = vmatprep.subr.bf16.mxu0 0
    %199 = vmatpush1.bf16.msra.mxu0 %v177
    %200 = vmatprep.subr.bf16.mxu0 0
    %201 = vmatpush1.bf16.msra.mxu0 %v176
    %202 = vmatprep.subr.bf16.mxu0 0
    %203 = vmatpush1.bf16.msra.mxu0 %v175
    %204 = vmatprep.subr.bf16.mxu0 0
    %205 = vmatpush1.bf16.msra.mxu0 %v174
    %206 = vmatprep.subr.bf16.mxu0 0
    %207 = vmatpush2.bf16.msra.mxu0 0
    %208 = vmatprep.subr.bf16.mxu0 0
    %209 = vmatpush2.bf16.msra.mxu0 0
    %210 = vmatprep.subr.bf16.mxu0 0
    %211 = vmatpush2.bf16.msra.mxu0 0
    %212 = vmatprep.subr.bf16.mxu0 0
    %213 = vmatpush2.bf16.msra.mxu0 0
    %214 = vmatprep.subr.bf16.mxu0 0
    %215 = vmatpush2.bf16.msra.mxu0 0
    %216 = vmatprep.subr.bf16.mxu0 0
    %217 = vmatpush2.bf16.msra.mxu0 0
    %218 = vmatprep.subr.bf16.mxu0 0
    %219 = vmatpush2.bf16.msra.mxu0 0
    %220 = vmatprep.subr.bf16.mxu0 0
    %221 = vmatpush2.bf16.msra.mxu0 0
    %222 = vmatprep.mubr.bf16.mxu0 0
    %223 = vmatmul.mubr.bf16.gmra.mxu0 %v118
    %v224 = vpop.f32.mrf.mxu0
    %v225 = vadd.f32 %v140, %v224
    %v226 = vpop.f32.mrf.mxu0
    %v227 = vpop.f32.mrf.mxu0
    %v228 = vadd.f32 %v140, %v227
    %v229 = vpop.f32.mrf.mxu0
    %230 = vdwg.mxu0
    %v231 = vmax.f32 %v225, 0.0
    %v232 = vmax.f32 %v228, 0.0
    %v233 = vpack.c.bf16 %v232, %v231
    %v234 = vld [vmem:[%s5] sm:$0xf]
    %v235 = vld [vmem:[%s5 + $0x4] sm:$0xf]
    %v236 = vld [vmem:[%s5 + $0x8] sm:$0xf]
    %v237 = vld [vmem:[%s5 + $0xc] sm:$0xf]
    %v238 = vld [vmem:[%s5 + $0x10] sm:$0xf]
    %v239 = vld [vmem:[%s5 + $0x14] sm:$0xf]
    %v240 = vld [vmem:[%s5 + $0x18] sm:$0xf]
    %v241 = vld [vmem:[%s5 + $0x1c] sm:$0xf]
    %v242 = vld [vmem:[%s5 + $0x20] sm:$0xf]
    %v243 = vld [vmem:[%s5 + $0x24] sm:$0xf]
    %v244 = vld [vmem:[%s5 + $0x28] sm:$0xf]
    %v245 = vld [vmem:[%s5 + $0x2c] sm:$0xf]
    %v246 = vld [vmem:[%s5 + $0x30] sm:$0xf]
    %v247 = vld [vmem:[%s5 + $0x34] sm:$0xf]
    %v248 = vld [vmem:[%s5 + $0x38] sm:$0xf]
    %v249 = vld [vmem:[%s5 + $0x3c] sm:$0xf]
    %v250 = vld [vmem:[%s6] sm:$0x1]
    %v252 = vlaneseq
    %v253 = vshrl.u32 %v252, 7
    %v254 = vsub.s32 0, %v253
    %v255 = vrot.slane %v250, %v254
    %v273 = vunpack.c.l.b16 %v234
    %v274 = vunpack.c.l.b16 %v235
    %v275 = vunpack.c.l.b16 %v236
    %v276 = vunpack.c.l.b16 %v237
    %v277 = vunpack.c.l.b16 %v238
    %v278 = vunpack.c.l.b16 %v239
    %v279 = vunpack.c.l.b16 %v240
    %v280 = vunpack.c.l.b16 %v241
    %v281 = vunpack.c.l.b16 %v242
    %v282 = vunpack.c.l.b16 %v243
    %v283 = vunpack.c.l.b16 %v244
    %v284 = vunpack.c.l.b16 %v245
    %v285 = vunpack.c.l.b16 %v246
    %v286 = vunpack.c.l.b16 %v247
    %v287 = vunpack.c.l.b16 %v248
    %v288 = vunpack.c.l.b16 %v249
    %v289 = vpack.c.b16 %v274, %v273
    %v290 = vpack.c.b16 %v276, %v275
    %v291 = vpack.c.b16 %v278, %v277
    %v292 = vpack.c.b16 %v280, %v279
    %v293 = vpack.c.b16 %v282, %v281
    %v294 = vpack.c.b16 %v284, %v283
    %v295 = vpack.c.b16 %v286, %v285
    %v296 = vpack.c.b16 %v288, %v287
    %305 = vmatprep.subr.bf16.mxu0 0
    %306 = vmatpush1.bf16.msra.mxu0 %v296
    %307 = vmatprep.subr.bf16.mxu0 0
    %308 = vmatpush1.bf16.msra.mxu0 %v295
    %309 = vmatprep.subr.bf16.mxu0 0
    %310 = vmatpush1.bf16.msra.mxu0 %v294
    %311 = vmatprep.subr.bf16.mxu0 0
    %312 = vmatpush1.bf16.msra.mxu0 %v293
    %313 = vmatprep.subr.bf16.mxu0 0
    %314 = vmatpush1.bf16.msra.mxu0 %v292
    %315 = vmatprep.subr.bf16.mxu0 0
    %316 = vmatpush1.bf16.msra.mxu0 %v291
    %317 = vmatprep.subr.bf16.mxu0 0
    %318 = vmatpush1.bf16.msra.mxu0 %v290
    %319 = vmatprep.subr.bf16.mxu0 0
    %320 = vmatpush1.bf16.msra.mxu0 %v289
    %321 = vmatprep.subr.bf16.mxu0 0
    %322 = vmatpush2.bf16.msra.mxu0 0
    %323 = vmatprep.subr.bf16.mxu0 0
    %324 = vmatpush2.bf16.msra.mxu0 0
    %325 = vmatprep.subr.bf16.mxu0 0
    %326 = vmatpush2.bf16.msra.mxu0 0
    %327 = vmatprep.subr.bf16.mxu0 0
    %328 = vmatpush2.bf16.msra.mxu0 0
    %329 = vmatprep.subr.bf16.mxu0 0
    %330 = vmatpush2.bf16.msra.mxu0 0
    %331 = vmatprep.subr.bf16.mxu0 0
    %332 = vmatpush2.bf16.msra.mxu0 0
    %333 = vmatprep.subr.bf16.mxu0 0
    %334 = vmatpush2.bf16.msra.mxu0 0
    %335 = vmatprep.subr.bf16.mxu0 0
    %336 = vmatpush2.bf16.msra.mxu0 0
    %337 = vmatprep.mubr.bf16.mxu0 0
    %338 = vmatmul.mubr.bf16.gmra.mxu0 %v233
    %v339 = vpop.f32.mrf.mxu0
    %v340 = vadd.f32 %v255, %v339
    %v341 = vpop.f32.mrf.mxu0
    %v342 = vpop.f32.mrf.mxu0
    %v343 = vadd.f32 %v255, %v342
    %v344 = vpop.f32.mrf.mxu0
    %345 = vdwg.mxu0
    %vm346 = vcmask 64512
    %347 = vst.msk [vmem:[%s7] sm:$0xff] %vm346, %v340
    %348 = vst.msk [vmem:[%s7 + $0x8] sm:$0xff] %vm346, %v343
    // Predicated region
    $region38: #{tpu_custom_call.1} parent=1 // pred_check
      _
    $region39: #{tpu_custom_call.1} parent=1 // pred_check_branch
      %350 = sbr.rel (0) target = $region41
    $region40: #{tpu_custom_call.1} parent=1 // pred_region
      _
    $region41: #{tpu_custom_call.1} parent=1 // pred_fallthru
      _
    // Predicated region
    $region42: #{tpu_custom_call.1} parent=1 // pred_check
      _
    $region43: #{tpu_custom_call.1} parent=1 // pred_check_branch
      %352 = sbr.rel (0) target = $region45
    $region44: #{tpu_custom_call.1} parent=1 // pred_region
      _
    $region45: #{tpu_custom_call.1} parent=1 // pred_fallthru
      _
    %353 = vsyncpa [#allocation3], 1
    %354 = vsyncpa [#allocation5], 1

// kernel: tpu_custom_call.1
$region0: #{tpu_custom_call.1}
  #allocation0 [shape = 'u32[]', space=smem, size = 0x4, offset = 0x4, fixed_abs, tag = 'smem constant byte address 0x4 - core index']
  #allocation1 [shape = 'u32[144,128]{1,0:T(1,128)}', space=vmem, size = 0x12000, scoped, tag = 'internal scratch']
  %s0 = inlined_call_operand.hbm [shape: f32[16,16], index: 0, kind: input, shape index: {}]
  %s1 = inlined_call_operand.vmem [shape: bf16[16,128], index: 1, kind: input, shape index: {}]
  %s2 = inlined_call_operand.vmem [shape: f32[1,128], index: 2, kind: input, shape index: {}]
  %s3 = inlined_call_operand.vmem [shape: bf16[128,128], index: 3, kind: input, shape index: {}]
  %s4 = inlined_call_operand.hbm [shape: f32[1,128], index: 4, kind: input, shape index: {}]
  %s5 = inlined_call_operand.vmem [shape: bf16[128,8], index: 5, kind: input, shape index: {}]
  %s6 = inlined_call_operand.vmem [shape: f32[1,8], index: 6, kind: input, shape index: {}]
  %s7 = inlined_call_operand.vmem [shape: f32[16,8], index: 7, kind: output, shape index: {}]
  %s8 = sld [smem:[#allocation0]]
  $region46: #{tpu_custom_call.1} parent=0
    _
  %s10 = ssub.s32 1, %s8
  %s11 = scalar_select 0, %s10, %s8
  $region1: #{tpu_custom_call.1} parent=0
    #allocation2 [shape = 'u8[8192]{0}', space=vmem, size = 0x2000, scoped, tag = 'input window, operand 0, single buffered']
    #allocation3 [shape = 's32[1]{0}', space=sflag, size = 0x4, scoped, tag = 'scoped memory for tpu_custom_call.1']
    #allocation4 [shape = 'u8[512]{0}', space=vmem, size = 0x400, scoped, tag = 'input window, operand 4, single buffered']
    #allocation5 [shape = 's32[1]{0}', space=sflag, size = 0x4, scoped, tag = 'scoped memory for tpu_custom_call.1']
    %12 = vsyncpa [#allocation3], 0
    %13 = vsyncpa [#allocation5], 0
    // Predicated region
    $region2: #{tpu_custom_call.1} parent=1 // pred_check
      _
    $region3: #{tpu_custom_call.1} parent=1 // pred_check_branch
      %15 = sbr.rel (0) target = $region5
    $region4: #{tpu_custom_call.1} parent=1 // pred_region
      %s17 = ssub.s32 256, 256
      %18 = vsyncadd [#allocation3], %s17
      %s19 = sshll.u32 [#allocation2], 4
      %s20 = int_to_ptr.vmem [resolvable:$true] %s19
      %25 = dma.hbm_to_vmem [thread:$0]  %s0, 256, %s20, [#allocation3], 128, 128, 8
    $region5: #{tpu_custom_call.1} parent=1 // pred_fallthru
      _
    // Predicated region
    $region6: #{tpu_custom_call.1} parent=1 // pred_check
      _
    $region7: #{tpu_custom_call.1} parent=1 // pred_check_branch
      %27 = sbr.rel (0) target = $region9
    $region8: #{tpu_custom_call.1} parent=1 // pred_region
      _
    $region9: #{tpu_custom_call.1} parent=1 // pred_fallthru
      _
    // Predicated region
    $region10: #{tpu_custom_call.1} parent=1 // pred_check
      _
    $region11: #{tpu_custom_call.1} parent=1 // pred_check_branch
      %29 = sbr.rel (0) target = $region13
    $region12: #{tpu_custom_call.1} parent=1 // pred_region
      _
    $region13: #{tpu_custom_call.1} parent=1 // pred_fallthru
      _
    // Predicated region
    $region14: #{tpu_custom_call.1} parent=1 // pred_check
      _
    $region15: #{tpu_custom_call.1} parent=1 // pred_check_branch
      %31 = sbr.rel (0) target = $region17
    $region16: #{tpu_custom_call.1} parent=1 // pred_region
      _
    $region17: #{tpu_custom_call.1} parent=1 // pred_fallthru
      _
    // Predicated region
    $region18: #{tpu_custom_call.1} parent=1 // pred_check
      _
    $region19: #{tpu_custom_call.1} parent=1 // pred_check_branch
      %33 = sbr.rel (0) target = $region21
    $region20: #{tpu_custom_call.1} parent=1 // pred_region
      %s35 = ssub.s32 16, 16
      %36 = vsyncadd [#allocation5], %s35
      %s38 = sshll.u32 [#allocation4], 4
      %s39 = int_to_ptr.vmem [resolvable:$true] %s38
      %41 = dma.hbm_to_vmem [thread:$0]  %s4, 16, %s39, [#allocation5]
    $region21: #{tpu_custom_call.1} parent=1 // pred_fallthru
      _
    // Predicated region
    $region22: #{tpu_custom_call.1} parent=1 // pred_check
      _
    $region23: #{tpu_custom_call.1} parent=1 // pred_check_branch
      %43 = sbr.rel (0) target = $region25
    $region24: #{tpu_custom_call.1} parent=1 // pred_region
      _
    $region25: #{tpu_custom_call.1} parent=1 // pred_fallthru
      _
    // Predicated region
    $region26: #{tpu_custom_call.1} parent=1 // pred_check
      _
    $region27: #{tpu_custom_call.1} parent=1 // pred_check_branch
      %45 = sbr.rel (0) target = $region29
    $region28: #{tpu_custom_call.1} parent=1 // pred_region
      _
    $region29: #{tpu_custom_call.1} parent=1 // pred_fallthru
      _
    // Predicated region
    $region30: #{tpu_custom_call.1} parent=1 // pred_check
      _
    $region31: #{tpu_custom_call.1} parent=1 // pred_check_branch
      %47 = sbr.rel (0) target = $region33
    $region32: #{tpu_custom_call.1} parent=1 // pred_region
      %48 = dma.done [#allocation3], 256
    $region33: #{tpu_custom_call.1} parent=1 // pred_fallthru
      _
    // Predicated region
    $region34: #{tpu_custom_call.1} parent=1 // pred_check
      _
    $region35: #{tpu_custom_call.1} parent=1 // pred_check_branch
      %50 = sbr.rel (0) target = $region37
    $region36: #{tpu_custom_call.1} parent=1 // pred_region
      %51 = dma.done [#allocation5], 16
    $region37: #{tpu_custom_call.1} parent=1 // pred_fallthru
      _
    %v53 = vld [vmem:[#allocation2] sm:$0xff]
    %v54 = vld [vmem:[#allocation2 + $0x8] sm:$0xff]
    %v55 = vpack.c.bf16 %v54, %v53
    %v56 = vld [vmem:[%s1] sm:$0xf]
    %v57 = vld [vmem:[%s1 + $0x4] sm:$0xf]
    %v58 = vld [vmem:[%s2] sm:$0x1]
    %v60 = vlaneseq
    %v61 = vshrl.u32 %v60, 7
    %v62 = vsub.s32 0, %v61
    %v63 = vrot.slane %v58, %v62
    %v67 = vunpack.c.l.b16 %v56
    %v68 = vunpack.c.l.b16 %v57
    %v69 = vpack.c.b16 %v68, %v67
    %vm71 = vcmask 130048
    %v73 = vsel %vm71, %v55, 0
    %75 = vmatprep.subr.bf16.mxu0 0
    %76 = vmatpush1.bf16.msra.mxu0 0
    %77 = vmatprep.subr.bf16.mxu0 0
    %78 = vmatpush1.bf16.msra.mxu0 0
    %79 = vmatprep.subr.bf16.mxu0 0
    %80 = vmatpush1.bf16.msra.mxu0 0
    %81 = vmatprep.subr.bf16.mxu0 0
    %82 = vmatpush1.bf16.msra.mxu0 0
    %83 = vmatprep.subr.bf16.mxu0 0
    %84 = vmatpush1.bf16.msra.mxu0 0
    %85 = vmatprep.subr.bf16.mxu0 0
    %86 = vmatpush1.bf16.msra.mxu0 0
    %87 = vmatprep.subr.bf16.mxu0 0
    %88 = vmatpush1.bf16.msra.mxu0 0
    %89 = vmatprep.subr.bf16.mxu0 0
    %90 = vmatpush1.bf16.msra.mxu0 %v69
    %91 = vmatprep.subr.bf16.mxu0 0
    %92 = vmatpush2.bf16.msra.mxu0 0
    %93 = vmatprep.subr.bf16.mxu0 0
    %94 = vmatpush2.bf16.msra.mxu0 0
    %95 = vmatprep.subr.bf16.mxu0 0
    %96 = vmatpush2.bf16.msra.mxu0 0
    %97 = vmatprep.subr.bf16.mxu0 0
    %98 = vmatpush2.bf16.msra.mxu0 0
    %99 = vmatprep.subr.bf16.mxu0 0
    %100 = vmatpush2.bf16.msra.mxu0 0
    %101 = vmatprep.subr.bf16.mxu0 0
    %102 = vmatpush2.bf16.msra.mxu0 0
    %103 = vmatprep.subr.bf16.mxu0 0
    %104 = vmatpush2.bf16.msra.mxu0 0
    %105 = vmatprep.subr.bf16.mxu0 0
    %106 = vmatpush2.bf16.msra.mxu0 0
    %107 = vmatprep.mubr.bf16.mxu0 0
    %108 = vmatmul.mubr.bf16.gmra.mxu0 %v73
    %v109 = vpop.f32.mrf.mxu0
    %v110 = vadd.f32 %v63, %v109
    %v111 = vpop.f32.mrf.mxu0
    %v112 = vpop.f32.mrf.mxu0
    %v113 = vadd.f32 %v63, %v112
    %v114 = vpop.f32.mrf.mxu0
    %115 = vdwg.mxu0
    %v116 = vmax.f32 %v110, 0.0
    %v117 = vmax.f32 %v113, 0.0
    %v118 = vpack.c.bf16 %v117, %v116
    %v119 = vld [vmem:[%s3] sm:$0xf]
    %v120 = vld [vmem:[%s3 + $0x4] sm:$0xf]
    %v121 = vld [vmem:[%s3 + $0x8] sm:$0xf]
    %v122 = vld [vmem:[%s3 + $0xc] sm:$0xf]
    %v123 = vld [vmem:[%s3 + $0x10] sm:$0xf]
    %v124 = vld [vmem:[%s3 + $0x14] sm:$0xf]
    %v125 = vld [vmem:[%s3 + $0x18] sm:$0xf]
    %v126 = vld [vmem:[%s3 + $0x1c] sm:$0xf]
    %v127 = vld [vmem:[%s3 + $0x20] sm:$0xf]
    %v128 = vld [vmem:[%s3 + $0x24] sm:$0xf]
    %v129 = vld [vmem:[%s3 + $0x28] sm:$0xf]
    %v130 = vld [vmem:[%s3 + $0x2c] sm:$0xf]
    %v131 = vld [vmem:[%s3 + $0x30] sm:$0xf]
    %v132 = vld [vmem:[%s3 + $0x34] sm:$0xf]
    %v133 = vld [vmem:[%s3 + $0x38] sm:$0xf]
    %v134 = vld [vmem:[%s3 + $0x3c] sm:$0xf]
    %v135 = vld [vmem:[#allocation4] sm:$0x1]
    %v137 = vlaneseq
    %v138 = vshrl.u32 %v137, 7
    %v139 = vsub.s32 0, %v138
    %v140 = vrot.slane %v135, %v139
    %v158 = vunpack.c.l.b16 %v119
    %v159 = vunpack.c.l.b16 %v120
    %v160 = vunpack.c.l.b16 %v121
    %v161 = vunpack.c.l.b16 %v122
    %v162 = vunpack.c.l.b16 %v123
    %v163 = vunpack.c.l.b16 %v124
    %v164 = vunpack.c.l.b16 %v125
    %v165 = vunpack.c.l.b16 %v126
    %v166 = vunpack.c.l.b16 %v127
    %v167 = vunpack.c.l.b16 %v128
    %v168 = vunpack.c.l.b16 %v129
    %v169 = vunpack.c.l.b16 %v130
    %v170 = vunpack.c.l.b16 %v131
    %v171 = vunpack.c.l.b16 %v132
    %v172 = vunpack.c.l.b16 %v133
    %v173 = vunpack.c.l.b16 %v134
    %v174 = vpack.c.b16 %v159, %v158
    %v175 = vpack.c.b16 %v161, %v160
    %v176 = vpack.c.b16 %v163, %v162
    %v177 = vpack.c.b16 %v165, %v164
    %v178 = vpack.c.b16 %v167, %v166
    %v179 = vpack.c.b16 %v169, %v168
    %v180 = vpack.c.b16 %v171, %v170
    %v181 = vpack.c.b16 %v173, %v172
    %190 = vmatprep.subr.bf16.mxu0 0
    %191 = vmatpush1.bf16.msra.mxu0 %v181
    %192 = vmatprep.subr.bf16.mxu0 0
    %193 = vmatpush1.bf16.msra.mxu0 %v180
    %194 = vmatprep.subr.bf16.mxu0 0
    %195 = vmatpush1.bf16.msra.mxu0 %v179
    %196 = vmatprep.subr.bf16.mxu0 0
    %197 = vmatpush1.bf16.msra.mxu0 %v178
    %198 = vmatprep.subr.bf16.mxu0 0
    %199 = vmatpush1.bf16.msra.mxu0 %v177
    %200 = vmatprep.subr.bf16.mxu0 0
    %201 = vmatpush1.bf16.msra.mxu0 %v176
    %202 = vmatprep.subr.bf16.mxu0 0
    %203 = vmatpush1.bf16.msra.mxu0 %v175
    %204 = vmatprep.subr.bf16.mxu0 0
    %205 = vmatpush1.bf16.msra.mxu0 %v174
    %206 = vmatprep.subr.bf16.mxu0 0
    %207 = vmatpush2.bf16.msra.mxu0 0
    %208 = vmatprep.subr.bf16.mxu0 0
    %209 = vmatpush2.bf16.msra.mxu0 0
    %210 = vmatprep.subr.bf16.mxu0 0
    %211 = vmatpush2.bf16.msra.mxu0 0
    %212 = vmatprep.subr.bf16.mxu0 0
    %213 = vmatpush2.bf16.msra.mxu0 0
    %214 = vmatprep.subr.bf16.mxu0 0
    %215 = vmatpush2.bf16.msra.mxu0 0
    %216 = vmatprep.subr.bf16.mxu0 0
    %217 = vmatpush2.bf16.msra.mxu0 0
    %218 = vmatprep.subr.bf16.mxu0 0
    %219 = vmatpush2.bf16.msra.mxu0 0
    %220 = vmatprep.subr.bf16.mxu0 0
    %221 = vmatpush2.bf16.msra.mxu0 0
    %222 = vmatprep.mubr.bf16.mxu0 0
    %223 = vmatmul.mubr.bf16.gmra.mxu0 %v118
    %v224 = vpop.f32.mrf.mxu0
    %v225 = vadd.f32 %v140, %v224
    %v226 = vpop.f32.mrf.mxu0
    %v227 = vpop.f32.mrf.mxu0
    %v228 = vadd.f32 %v140, %v227
    %v229 = vpop.f32.mrf.mxu0
    %230 = vdwg.mxu0
    %v231 = vmax.f32 %v225, 0.0
    %v232 = vmax.f32 %v228, 0.0
    %v233 = vpack.c.bf16 %v232, %v231
    %v234 = vld [vmem:[%s5] sm:$0xf]
    %v235 = vld [vmem:[%s5 + $0x4] sm:$0xf]
    %v236 = vld [vmem:[%s5 + $0x8] sm:$0xf]
    %v237 = vld [vmem:[%s5 + $0xc] sm:$0xf]
    %v238 = vld [vmem:[%s5 + $0x10] sm:$0xf]
    %v239 = vld [vmem:[%s5 + $0x14] sm:$0xf]
    %v240 = vld [vmem:[%s5 + $0x18] sm:$0xf]
    %v241 = vld [vmem:[%s5 + $0x1c] sm:$0xf]
    %v242 = vld [vmem:[%s5 + $0x20] sm:$0xf]
    %v243 = vld [vmem:[%s5 + $0x24] sm:$0xf]
    %v244 = vld [vmem:[%s5 + $0x28] sm:$0xf]
    %v245 = vld [vmem:[%s5 + $0x2c] sm:$0xf]
    %v246 = vld [vmem:[%s5 + $0x30] sm:$0xf]
    %v247 = vld [vmem:[%s5 + $0x34] sm:$0xf]
    %v248 = vld [vmem:[%s5 + $0x38] sm:$0xf]
    %v249 = vld [vmem:[%s5 + $0x3c] sm:$0xf]
    %v250 = vld [vmem:[%s6] sm:$0x1]
    %v252 = vlaneseq
    %v253 = vshrl.u32 %v252, 7
    %v254 = vsub.s32 0, %v253
    %v255 = vrot.slane %v250, %v254
    %v273 = vunpack.c.l.b16 %v234
    %v274 = vunpack.c.l.b16 %v235
    %v275 = vunpack.c.l.b16 %v236
    %v276 = vunpack.c.l.b16 %v237
    %v277 = vunpack.c.l.b16 %v238
    %v278 = vunpack.c.l.b16 %v239
    %v279 = vunpack.c.l.b16 %v240
    %v280 = vunpack.c.l.b16 %v241
    %v281 = vunpack.c.l.b16 %v242
    %v282 = vunpack.c.l.b16 %v243
    %v283 = vunpack.c.l.b16 %v244
    %v284 = vunpack.c.l.b16 %v245
    %v285 = vunpack.c.l.b16 %v246
    %v286 = vunpack.c.l.b16 %v247
    %v287 = vunpack.c.l.b16 %v248
    %v288 = vunpack.c.l.b16 %v249
    %v289 = vpack.c.b16 %v274, %v273
    %v290 = vpack.c.b16 %v276, %v275
    %v291 = vpack.c.b16 %v278, %v277
    %v292 = vpack.c.b16 %v280, %v279
    %v293 = vpack.c.b16 %v282, %v281
    %v294 = vpack.c.b16 %v284, %v283
    %v295 = vpack.c.b16 %v286, %v285
    %v296 = vpack.c.b16 %v288, %v287
    %305 = vmatprep.subr.bf16.mxu0 0
    %306 = vmatpush1.bf16.msra.mxu0 %v296
    %307 = vmatprep.subr.bf16.mxu0 0
    %308 = vmatpush1.bf16.msra.mxu0 %v295
    %309 = vmatprep.subr.bf16.mxu0 0
    %310 = vmatpush1.bf16.msra.mxu0 %v294
    %311 = vmatprep.subr.bf16.mxu0 0
    %312 = vmatpush1.bf16.msra.mxu0 %v293
    %313 = vmatprep.subr.bf16.mxu0 0
    %314 = vmatpush1.bf16.msra.mxu0 %v292
    %315 = vmatprep.subr.bf16.mxu0 0
    %316 = vmatpush1.bf16.msra.mxu0 %v291
    %317 = vmatprep.subr.bf16.mxu0 0
    %318 = vmatpush1.bf16.msra.mxu0 %v290
    %319 = vmatprep.subr.bf16.mxu0 0
    %320 = vmatpush1.bf16.msra.mxu0 %v289
    %321 = vmatprep.subr.bf16.mxu0 0
    %322 = vmatpush2.bf16.msra.mxu0 0
    %323 = vmatprep.subr.bf16.mxu0 0
    %324 = vmatpush2.bf16.msra.mxu0 0
    %325 = vmatprep.subr.bf16.mxu0 0
    %326 = vmatpush2.bf16.msra.mxu0 0
    %327 = vmatprep.subr.bf16.mxu0 0
    %328 = vmatpush2.bf16.msra.mxu0 0
    %329 = vmatprep.subr.bf16.mxu0 0
    %330 = vmatpush2.bf16.msra.mxu0 0
    %331 = vmatprep.subr.bf16.mxu0 0
    %332 = vmatpush2.bf16.msra.mxu0 0
    %333 = vmatprep.subr.bf16.mxu0 0
    %334 = vmatpush2.bf16.msra.mxu0 0
    %335 = vmatprep.subr.bf16.mxu0 0
    %336 = vmatpush2.bf16.msra.mxu0 0
    %337 = vmatprep.mubr.bf16.mxu0 0
    %338 = vmatmul.mubr.bf16.gmra.mxu0 %v233
    %v339 = vpop.f32.mrf.mxu0
    %v340 = vadd.f32 %v255, %v339
    %v341 = vpop.f32.mrf.mxu0
    %v342 = vpop.f32.mrf.mxu0
    %v343 = vadd.f32 %v255, %v342
    %v344 = vpop.f32.mrf.mxu0
    %345 = vdwg.mxu0
    %vm346 = vcmask 64512
    %347 = vst.msk [vmem:[%s7] sm:$0xff] %vm346, %v340
    %348 = vst.msk [vmem:[%s7 + $0x8] sm:$0xff] %vm346, %v343
    // Predicated region
    $region38: #{tpu_custom_call.1} parent=1 // pred_check
      _
    $region39: #{tpu_custom_call.1} parent=1 // pred_check_branch
      %350 = sbr.rel (0) target = $region41
    $region40: #{tpu_custom_call.1} parent=1 // pred_region
      _
    $region41: #{tpu_custom_call.1} parent=1 // pred_fallthru
      _
    // Predicated region
    $region42: #{tpu_custom_call.1} parent=1 // pred_check
      _
    $region43: #{tpu_custom_call.1} parent=1 // pred_check_branch
      %352 = sbr.rel (0) target = $region45
    $region44: #{tpu_custom_call.1} parent=1 // pred_region
      _
    $region45: #{tpu_custom_call.1} parent=1 // pred_fallthru
      _
    %353 = vsyncpa [#allocation3], 1
    %354 = vsyncpa [#allocation5], 1

</llo_original>
